<compile_context>
chip_gen: v7x
topology: tpu7x:2x2x1
jax: 0.10.0
libtpu: 0.0.40
codegen_flags: <defaults>
</compile_context>

<pallas_src>
import functools

import jax
import jax.numpy as jnp
import numpy as np
from jax.experimental import pallas as pl
from jax.experimental.pallas import tpu as pltpu


# ---------------------------------------------------------------------------
# Module configuration (mirrors Classifier_Module(inplanes, dil, pad, classes))
# ---------------------------------------------------------------------------
INPLANES = 4
NUM_CLASSES = 4
DILATION_SERIES = [1, 2, 3, 4]
PADDING_SERIES = [1, 2, 3, 4]
# Only the first two branches participate in forward() (early return in the loop).
ACTIVE = 2
ACTIVE_DIL = tuple(DILATION_SERIES[:ACTIVE])
ACTIVE_PAD = tuple(PADDING_SERIES[:ACTIVE])
KTAPS = ACTIVE * 9                  # (branch, ky, kx) taps
KDIM = KTAPS * INPLANES             # contraction size of the fused im2col matmul


def _multi_tensorcore_chip():
    """True on chips where a parallel batch grid axis can use >1 TensorCore."""
    try:
        kind = jax.devices()[0].device_kind.lower()
    except Exception:
        return False
    return any(tag in kind for tag in ("v7", "v4", "v5p"))


def _taps_and_mask(height, width, cin):
    """Static lane shift per tap + (KDIM, HW) f32 validity mask (host precomputed).

    Row order of the mask matches the patches matrix: row = 4*t + ci, with the
    tap index t ordered (branch, ky, kx).  The mask reproduces Conv2d zero
    padding AND zeroes the circular wrap-around garbage of pltpu.roll.
    """
    hw = height * width
    hh = np.repeat(np.arange(height), width)          # (HW,)
    ww = np.tile(np.arange(width), height)             # (HW,)
    shifts, rows = [], []
    for d, p in zip(ACTIVE_DIL, ACTIVE_PAD):
        for ky in range(3):
            for kx in range(3):
                dy, dx = ky * d - p, kx * d - p
                shifts.append(dy * width + dx)
                valid = ((hh + dy >= 0) & (hh + dy < height) &
                         (ww + dx >= 0) & (ww + dx < width))
                rows.append(np.broadcast_to(valid, (cin, hw)))
    mask = np.concatenate(rows, axis=0).astype(np.float32)   # (KDIM, HW)
    assert mask.shape == (KDIM, hw)
    return tuple(shifts), mask


# ---------------------------------------------------------------------------
# Pallas kernel: roll+mask im2col (aligned pair stores) + one fused MXU matmul
# ---------------------------------------------------------------------------
def _classifier_kernel(x_ref, mask_ref, wmat_ref, b_ref, out_ref, patches_ref,
                       *, hw, shifts, cin, bsz):
    # x_ref      : (bsz, Cin, HW)    channels on sublanes, flat spatial on lanes
    # mask_ref   : (KDIM, HW) f32    tap validity, replicated across the Cin rows
    # wmat_ref   : (Cout, KDIM)      fused weights, K ordered (branch, ky, kx, ci)
    # b_ref      : (Cout, 1)         summed biases of the two active branches
    # out_ref    : (bsz, Cout, HW)
    # patches_ref: (KDIM, bsz*HW)    VMEM scratch, im2col matrix
    two_cin = 2 * cin
    n_pairs = len(shifts) // 2
    # Sublane selector (built once): rows [0, cin) take the even tap of a pair,
    # rows [cin, 2*cin) the odd tap.
    top_rows = jax.lax.broadcasted_iota(jnp.int32, (two_cin, hw), 0) < cin

    # ---- im2col build: per image, 9 full (8, HW) aligned, unmasked stores ----
    for b in range(bsz):
        xb = x_ref[b]                                    # (Cin, HW)
        x2 = jnp.concatenate([xb, xb], axis=0)           # (2*Cin, HW), built once
        for p in range(n_pairs):
            k0 = (-shifts[2 * p]) % hw
            k1 = (-shifts[2 * p + 1]) % hw
            r0 = x2 if k0 == 0 else pltpu.roll(x2, shift=k0, axis=1)   # XLU
            r1 = x2 if k1 == 0 else pltpu.roll(x2, shift=k1, axis=1)   # XLU
            pair = jnp.where(top_rows, r0, r1)                          # 1 select
            pair = pair * mask_ref[p * two_cin:(p + 1) * two_cin, :]    # 1 mul
            patches_ref[p * two_cin:(p + 1) * two_cin,
                        b * hw:(b + 1) * hw] = pair                     # aligned vst

    # ---- single fused MXU contraction + folded bias ----
    acc = jnp.dot(wmat_ref[...], patches_ref[...],
                  preferred_element_type=jnp.float32)                   # (Cout, bsz*HW)
    acc = acc + b_ref[...]

    # ---- NCHW-ordered, lane-dense output stores (one per image) ----
    for b in range(bsz):
        out_ref[b] = acc[:, b * hw:(b + 1) * hw].astype(out_ref.dtype)


# ---------------------------------------------------------------------------
# Wrapper: NCHW in / NCHW out; only row-major metadata reshapes outside the kernel
# ---------------------------------------------------------------------------
def classifier_module_forward(x_nchw, weights_oihw, biases, *, images_per_step=None):
    """x_nchw: (N, Cin, H, W); weights_oihw: list of (Cout, Cin, 3, 3); biases: list of (Cout,)."""
    n, cin, height, width = x_nchw.shape
    cout = weights_oihw[0].shape[0]
    hw = height * width
    assert cin == INPLANES and cout == NUM_CLASSES
    # Same-size convs (padding == dilation) for the active branches.
    assert all(d == p for d, p in zip(ACTIVE_DIL, ACTIVE_PAD))
    assert hw % 128 == 0, "flattened spatial axis must be lane-aligned"
    assert 2 * cin == 8, "tap pairing assumes Cin == 4 (two taps per 8-sublane tile)"

    # Generation-aware grid:
    #   v5e/v6e (1 TC): collapse the batch into one fat grid step.
    #   v7x/v4/v5p (multi-core): keep grid=(N,) "parallel" across cores.
    if images_per_step is None:
        images_per_step = 1 if (_multi_tensorcore_chip() and n > 1) else n
    bsz = images_per_step
    assert n % bsz == 0
    grid = (n // bsz,)

    # Row-major reshape only: no transpose, no jnp.pad (masking handles padding).
    x_flat = x_nchw.reshape(n, cin, hw)

    # Fused (Cout, K) weight matrix, K ordered (branch, ky, kx, ci); the two
    # active biases folded into a single (Cout, 1) vector (one add in-kernel).
    w_act = jnp.stack([weights_oihw[c] for c in range(ACTIVE)], axis=0)   # (A, Cout, Cin, 3, 3)
    w_mat = jnp.transpose(w_act, (1, 0, 3, 4, 2)).reshape(cout, KDIM)     # (Cout, K)
    b_tot = sum(biases[c] for c in range(ACTIVE)).reshape(cout, 1)        # (Cout, 1)

    # Host-precomputed tap shifts + validity mask (compile-time constants).
    shifts, mask_np = _taps_and_mask(height, width, cin)

    kernel = functools.partial(_classifier_kernel, hw=hw, shifts=shifts,
                               cin=cin, bsz=bsz)

    out_flat = pl.pallas_call(
        kernel,
        out_shape=jax.ShapeDtypeStruct((n, cout, hw), jnp.float32),
        grid=grid,
        in_specs=[
            pl.BlockSpec((bsz, cin, hw), lambda i: (i, 0, 0)),
            pl.BlockSpec((KDIM, hw), lambda i: (0, 0)),
            pl.BlockSpec((cout, KDIM), lambda i: (0, 0)),
            pl.BlockSpec((cout, 1), lambda i: (0, 0)),
        ],
        out_specs=pl.BlockSpec((bsz, cout, hw), lambda i: (i, 0, 0)),
        scratch_shapes=[
            pltpu.VMEM((KDIM, bsz * hw), jnp.float32),   # im2col matrix
        ],
        compiler_params=pltpu.CompilerParams(
            dimension_semantics=("parallel",)),
    )(x_flat, jnp.asarray(mask_np), w_mat, b_tot)

    # Output is already channel-major (NCHW-flattened): just split the spatial axis.
    return out_flat.reshape(n, cout, height, width)


# ---------------------------------------------------------------------------
# Pure-JAX reference (matches PyTorch Conv2d semantics) for a sanity check
# ---------------------------------------------------------------------------
def _reference(x_nchw, weights_oihw, biases):
    outs = []
    for c in range(ACTIVE):
        d, p = ACTIVE_DIL[c], ACTIVE_PAD[c]
        y = jax.lax.conv_general_dilated(
            x_nchw, weights_oihw[c], window_strides=(1, 1),
            padding=[(p, p), (p, p)], rhs_dilation=(d, d),
            dimension_numbers=("NCHW", "OIHW", "NCHW"))
        outs.append(y + biases[c][None, :, None, None])
    return outs[0] + outs[1]


if __name__ == "__main__":
    key = jax.random.PRNGKey(0)
    N, H, W = 2, 16, 16

    kx, *kws = jax.random.split(key, 1 + 2 * len(DILATION_SERIES))
    x = jax.random.normal(kx, (N, INPLANES, H, W), dtype=jnp.float32)

    # Deterministic parameter init for ALL branches declared in __init__
    # (even though only the first two are used in forward).
    weights, biases = [], []
    for i in range(len(DILATION_SERIES)):
        weights.append(0.1 * jax.random.normal(
            kws[2 * i], (NUM_CLASSES, INPLANES, 3, 3), dtype=jnp.float32))
        biases.append(0.1 * jax.random.normal(
            kws[2 * i + 1], (NUM_CLASSES,), dtype=jnp.float32))

    out = classifier_module_forward(x, weights, biases)
    out = jax.block_until_ready(out)

    ref = _reference(x, weights, biases)
    assert out.shape == (N, NUM_CLASSES, H, W)
    assert jnp.allclose(out, ref, atol=1e-3, rtol=1e-3), "mismatch vs. conv reference"

    print("KERNEL_OK")
</pallas_src>

<mosaic_0001>
module attributes {stable_mosaic.version = 11 : i64} {
  func.func @_classifier_kernel(%arg0: i32, %arg1: memref<2x4x256xf32, #tpu.memory_space<vmem>>, %arg2: memref<72x256xf32, #tpu.memory_space<vmem>>, %arg3: memref<4x72xf32, #tpu.memory_space<vmem>>, %arg4: memref<4x1xf32, #tpu.memory_space<vmem>>, %arg5: memref<2x4x256xf32, #tpu.memory_space<vmem>>, %arg6: memref<72x512xf32, #tpu.memory_space<vmem>>) attributes {dimension_semantics = [#tpu.dimension_semantics<parallel>], iteration_bounds = array<i64: 1>, scalar_prefetch = 0 : i64, scratch_operands = 1 : i64, tpu.core_type = #tpu.core_type<tc>, window_params = [{transform_indices = @transform_0, window_bounds = array<i64: 2, 4, 256>}, {pipeline_mode = #tpu.pipeline_mode<synchronous>, transform_indices = @transform_1, window_bounds = array<i64: 72, 256>}, {pipeline_mode = #tpu.pipeline_mode<synchronous>, transform_indices = @transform_2, window_bounds = array<i64: 4, 72>}, {pipeline_mode = #tpu.pipeline_mode<synchronous>, transform_indices = @transform_3, window_bounds = array<i64: 4, 1>}, {transform_indices = @transform_4, window_bounds = array<i64: 2, 4, 256>}]} {
    %0 = tpu.iota {dimensions = array<i32: 0>} : vector<8x256xi32>
    %c4_i32 = arith.constant 4 : i32
    %1 = vector.broadcast %c4_i32 : i32 to vector<8x256xi32>
    %2 = arith.cmpi slt, %0, %1 : vector<8x256xi32>
    %c0 = arith.constant 0 : index
    %c0_0 = arith.constant 0 : index
    %c0_1 = arith.constant 0 : index
    %3 = vector.load %arg1[%c0, %c0_0, %c0_1] : memref<2x4x256xf32, #tpu.memory_space<vmem>>, vector<1x4x256xf32>
    %4 = vector.shape_cast %3 : vector<1x4x256xf32> to vector<4x256xf32>
    %5 = tpu.concatenate %4, %4 in 0 : vector<4x256xf32>, vector<4x256xf32> -> vector<8x256xf32>
    %c17_i32 = arith.constant 17 : i32
    %6 = tpu.dynamic_rotate %5 by %c17_i32 dim 1 : vector<8x256xf32>, i32 -> vector<8x256xf32>
    %c16_i32 = arith.constant 16 : i32
    %7 = tpu.dynamic_rotate %5 by %c16_i32 dim 1 : vector<8x256xf32>, i32 -> vector<8x256xf32>
    %8 = arith.select %2, %6, %7 : vector<8x256xi1>, vector<8x256xf32>
    %c0_2 = arith.constant 0 : index
    %c0_3 = arith.constant 0 : index
    %9 = vector.load %arg2[%c0_2, %c0_3] : memref<72x256xf32, #tpu.memory_space<vmem>>, vector<8x256xf32>
    %10 = arith.mulf %8, %9 : vector<8x256xf32>
    %c0_4 = arith.constant 0 : index
    %c0_5 = arith.constant 0 : index
    %11 = vector.load %arg6[%c0_4, %c0_5] : memref<72x512xf32, #tpu.memory_space<vmem>>, vector<8x256xf32>
    tpu.vector_store %arg6[%c0_4, %c0_5], %10 {strides = array<i32>} : memref<72x512xf32, #tpu.memory_space<vmem>>, vector<8x256xf32>,
    %c15_i32 = arith.constant 15 : i32
    %12 = tpu.dynamic_rotate %5 by %c15_i32 dim 1 : vector<8x256xf32>, i32 -> vector<8x256xf32>
    %c1_i32 = arith.constant 1 : i32
    %13 = tpu.dynamic_rotate %5 by %c1_i32 dim 1 : vector<8x256xf32>, i32 -> vector<8x256xf32>
    %14 = arith.select %2, %12, %13 : vector<8x256xi1>, vector<8x256xf32>
    %c8 = arith.constant 8 : index
    %c0_6 = arith.constant 0 : index
    %15 = vector.load %arg2[%c8, %c0_6] : memref<72x256xf32, #tpu.memory_space<vmem>>, vector<8x256xf32>
    %16 = arith.mulf %14, %15 : vector<8x256xf32>
    %c8_7 = arith.constant 8 : index
    %c0_8 = arith.constant 0 : index
    %17 = vector.load %arg6[%c8_7, %c0_8] : memref<72x512xf32, #tpu.memory_space<vmem>>, vector<8x256xf32>
    tpu.vector_store %arg6[%c8_7, %c0_8], %16 {strides = array<i32>} : memref<72x512xf32, #tpu.memory_space<vmem>>, vector<8x256xf32>,
    %c255_i32 = arith.constant 255 : i32
    %18 = tpu.dynamic_rotate %5 by %c255_i32 dim 1 : vector<8x256xf32>, i32 -> vector<8x256xf32>
    %19 = arith.select %2, %5, %18 : vector<8x256xi1>, vector<8x256xf32>
    %c16 = arith.constant 16 : index
    %c0_9 = arith.constant 0 : index
    %20 = vector.load %arg2[%c16, %c0_9] : memref<72x256xf32, #tpu.memory_space<vmem>>, vector<8x256xf32>
    %21 = arith.mulf %19, %20 : vector<8x256xf32>
    %c16_10 = arith.constant 16 : index
    %c0_11 = arith.constant 0 : index
    %22 = vector.load %arg6[%c16_10, %c0_11] : memref<72x512xf32, #tpu.memory_space<vmem>>, vector<8x256xf32>
    tpu.vector_store %arg6[%c16_10, %c0_11], %21 {strides = array<i32>} : memref<72x512xf32, #tpu.memory_space<vmem>>, vector<8x256xf32>,
    %c241_i32 = arith.constant 241 : i32
    %23 = tpu.dynamic_rotate %5 by %c241_i32 dim 1 : vector<8x256xf32>, i32 -> vector<8x256xf32>
    %c240_i32 = arith.constant 240 : i32
    %24 = tpu.dynamic_rotate %5 by %c240_i32 dim 1 : vector<8x256xf32>, i32 -> vector<8x256xf32>
    %25 = arith.select %2, %23, %24 : vector<8x256xi1>, vector<8x256xf32>
    %c24 = arith.constant 24 : index
    %c0_12 = arith.constant 0 : index
    %26 = vector.load %arg2[%c24, %c0_12] : memref<72x256xf32, #tpu.memory_space<vmem>>, vector<8x256xf32>
    %27 = arith.mulf %25, %26 : vector<8x256xf32>
    %c24_13 = arith.constant 24 : index
    %c0_14 = arith.constant 0 : index
    %28 = vector.load %arg6[%c24_13, %c0_14] : memref<72x512xf32, #tpu.memory_space<vmem>>, vector<8x256xf32>
    tpu.vector_store %arg6[%c24_13, %c0_14], %27 {strides = array<i32>} : memref<72x512xf32, #tpu.memory_space<vmem>>, vector<8x256xf32>,
    %c239_i32 = arith.constant 239 : i32
    %29 = tpu.dynamic_rotate %5 by %c239_i32 dim 1 : vector<8x256xf32>, i32 -> vector<8x256xf32>
    %c34_i32 = arith.constant 34 : i32
    %30 = tpu.dynamic_rotate %5 by %c34_i32 dim 1 : vector<8x256xf32>, i32 -> vector<8x256xf32>
    %31 = arith.select %2, %29, %30 : vector<8x256xi1>, vector<8x256xf32>
    %c32 = arith.constant 32 : index
    %c0_15 = arith.constant 0 : index
    %32 = vector.load %arg2[%c32, %c0_15] : memref<72x256xf32, #tpu.memory_space<vmem>>, vector<8x256xf32>
    %33 = arith.mulf %31, %32 : vector<8x256xf32>
    %c32_16 = arith.constant 32 : index
    %c0_17 = arith.constant 0 : index
    %34 = vector.load %arg6[%c32_16, %c0_17] : memref<72x512xf32, #tpu.memory_space<vmem>>, vector<8x256xf32>
    tpu.vector_store %arg6[%c32_16, %c0_17], %33 {strides = array<i32>} : memref<72x512xf32, #tpu.memory_space<vmem>>, vector<8x256xf32>,
    %c32_i32 = arith.constant 32 : i32
    %35 = tpu.dynamic_rotate %5 by %c32_i32 dim 1 : vector<8x256xf32>, i32 -> vector<8x256xf32>
    %c30_i32 = arith.constant 30 : i32
    %36 = tpu.dynamic_rotate %5 by %c30_i32 dim 1 : vector<8x256xf32>, i32 -> vector<8x256xf32>
    %37 = arith.select %2, %35, %36 : vector<8x256xi1>, vector<8x256xf32>
    %c40 = arith.constant 40 : index
    %c0_18 = arith.constant 0 : index
    %38 = vector.load %arg2[%c40, %c0_18] : memref<72x256xf32, #tpu.memory_space<vmem>>, vector<8x256xf32>
    %39 = arith.mulf %37, %38 : vector<8x256xf32>
    %c40_19 = arith.constant 40 : index
    %c0_20 = arith.constant 0 : index
    %40 = vector.load %arg6[%c40_19, %c0_20] : memref<72x512xf32, #tpu.memory_space<vmem>>, vector<8x256xf32>
    tpu.vector_store %arg6[%c40_19, %c0_20], %39 {strides = array<i32>} : memref<72x512xf32, #tpu.memory_space<vmem>>, vector<8x256xf32>,
    %c2_i32 = arith.constant 2 : i32
    %41 = tpu.dynamic_rotate %5 by %c2_i32 dim 1 : vector<8x256xf32>, i32 -> vector<8x256xf32>
    %42 = arith.select %2, %41, %5 : vector<8x256xi1>, vector<8x256xf32>
    %c48 = arith.constant 48 : index
    %c0_21 = arith.constant 0 : index
    %43 = vector.load %arg2[%c48, %c0_21] : memref<72x256xf32, #tpu.memory_space<vmem>>, vector<8x256xf32>
    %44 = arith.mulf %42, %43 : vector<8x256xf32>
    %c48_22 = arith.constant 48 : index
    %c0_23 = arith.constant 0 : index
    %45 = vector.load %arg6[%c48_22, %c0_23] : memref<72x512xf32, #tpu.memory_space<vmem>>, vector<8x256xf32>
    tpu.vector_store %arg6[%c48_22, %c0_23], %44 {strides = array<i32>} : memref<72x512xf32, #tpu.memory_space<vmem>>, vector<8x256xf32>,
    %c254_i32 = arith.constant 254 : i32
    %46 = tpu.dynamic_rotate %5 by %c254_i32 dim 1 : vector<8x256xf32>, i32 -> vector<8x256xf32>
    %c226_i32 = arith.constant 226 : i32
    %47 = tpu.dynamic_rotate %5 by %c226_i32 dim 1 : vector<8x256xf32>, i32 -> vector<8x256xf32>
    %48 = arith.select %2, %46, %47 : vector<8x256xi1>, vector<8x256xf32>
    %c56 = arith.constant 56 : index
    %c0_24 = arith.constant 0 : index
    %49 = vector.load %arg2[%c56, %c0_24] : memref<72x256xf32, #tpu.memory_space<vmem>>, vector<8x256xf32>
    %50 = arith.mulf %48, %49 : vector<8x256xf32>
    %c56_25 = arith.constant 56 : index
    %c0_26 = arith.constant 0 : index
    %51 = vector.load %arg6[%c56_25, %c0_26] : memref<72x512xf32, #tpu.memory_space<vmem>>, vector<8x256xf32>
    tpu.vector_store %arg6[%c56_25, %c0_26], %50 {strides = array<i32>} : memref<72x512xf32, #tpu.memory_space<vmem>>, vector<8x256xf32>,
    %c224_i32 = arith.constant 224 : i32
    %52 = tpu.dynamic_rotate %5 by %c224_i32 dim 1 : vector<8x256xf32>, i32 -> vector<8x256xf32>
    %c222_i32 = arith.constant 222 : i32
    %53 = tpu.dynamic_rotate %5 by %c222_i32 dim 1 : vector<8x256xf32>, i32 -> vector<8x256xf32>
    %54 = arith.select %2, %52, %53 : vector<8x256xi1>, vector<8x256xf32>
    %c64 = arith.constant 64 : index
    %c0_27 = arith.constant 0 : index
    %55 = vector.load %arg2[%c64, %c0_27] : memref<72x256xf32, #tpu.memory_space<vmem>>, vector<8x256xf32>
    %56 = arith.mulf %54, %55 : vector<8x256xf32>
    %c64_28 = arith.constant 64 : index
    %c0_29 = arith.constant 0 : index
    %57 = vector.load %arg6[%c64_28, %c0_29] : memref<72x512xf32, #tpu.memory_space<vmem>>, vector<8x256xf32>
    tpu.vector_store %arg6[%c64_28, %c0_29], %56 {strides = array<i32>} : memref<72x512xf32, #tpu.memory_space<vmem>>, vector<8x256xf32>,
    %c1 = arith.constant 1 : index
    %c0_30 = arith.constant 0 : index
    %c0_31 = arith.constant 0 : index
    %58 = vector.load %arg1[%c1, %c0_30, %c0_31] : memref<2x4x256xf32, #tpu.memory_space<vmem>>, vector<1x4x256xf32>
    %59 = vector.shape_cast %58 : vector<1x4x256xf32> to vector<4x256xf32>
    %60 = tpu.concatenate %59, %59 in 0 : vector<4x256xf32>, vector<4x256xf32> -> vector<8x256xf32>
    %c17_i32_32 = arith.constant 17 : i32
    %61 = tpu.dynamic_rotate %60 by %c17_i32_32 dim 1 : vector<8x256xf32>, i32 -> vector<8x256xf32>
    %c16_i32_33 = arith.constant 16 : i32
    %62 = tpu.dynamic_rotate %60 by %c16_i32_33 dim 1 : vector<8x256xf32>, i32 -> vector<8x256xf32>
    %63 = arith.select %2, %61, %62 : vector<8x256xi1>, vector<8x256xf32>
    %c0_34 = arith.constant 0 : index
    %c0_35 = arith.constant 0 : index
    %64 = vector.load %arg2[%c0_34, %c0_35] : memref<72x256xf32, #tpu.memory_space<vmem>>, vector<8x256xf32>
    %65 = arith.mulf %63, %64 : vector<8x256xf32>
    %c0_36 = arith.constant 0 : index
    %c256 = arith.constant 256 : index
    %66 = vector.load %arg6[%c0_36, %c256] : memref<72x512xf32, #tpu.memory_space<vmem>>, vector<8x256xf32>
    tpu.vector_store %arg6[%c0_36, %c256], %65 {strides = array<i32>} : memref<72x512xf32, #tpu.memory_space<vmem>>, vector<8x256xf32>,
    %c15_i32_37 = arith.constant 15 : i32
    %67 = tpu.dynamic_rotate %60 by %c15_i32_37 dim 1 : vector<8x256xf32>, i32 -> vector<8x256xf32>
    %c1_i32_38 = arith.constant 1 : i32
    %68 = tpu.dynamic_rotate %60 by %c1_i32_38 dim 1 : vector<8x256xf32>, i32 -> vector<8x256xf32>
    %69 = arith.select %2, %67, %68 : vector<8x256xi1>, vector<8x256xf32>
    %c8_39 = arith.constant 8 : index
    %c0_40 = arith.constant 0 : index
    %70 = vector.load %arg2[%c8_39, %c0_40] : memref<72x256xf32, #tpu.memory_space<vmem>>, vector<8x256xf32>
    %71 = arith.mulf %69, %70 : vector<8x256xf32>
    %c8_41 = arith.constant 8 : index
    %c256_42 = arith.constant 256 : index
    %72 = vector.load %arg6[%c8_41, %c256_42] : memref<72x512xf32, #tpu.memory_space<vmem>>, vector<8x256xf32>
    tpu.vector_store %arg6[%c8_41, %c256_42], %71 {strides = array<i32>} : memref<72x512xf32, #tpu.memory_space<vmem>>, vector<8x256xf32>,
    %c255_i32_43 = arith.constant 255 : i32
    %73 = tpu.dynamic_rotate %60 by %c255_i32_43 dim 1 : vector<8x256xf32>, i32 -> vector<8x256xf32>
    %74 = arith.select %2, %60, %73 : vector<8x256xi1>, vector<8x256xf32>
    %c16_44 = arith.constant 16 : index
    %c0_45 = arith.constant 0 : index
    %75 = vector.load %arg2[%c16_44, %c0_45] : memref<72x256xf32, #tpu.memory_space<vmem>>, vector<8x256xf32>
    %76 = arith.mulf %74, %75 : vector<8x256xf32>
    %c16_46 = arith.constant 16 : index
    %c256_47 = arith.constant 256 : index
    %77 = vector.load %arg6[%c16_46, %c256_47] : memref<72x512xf32, #tpu.memory_space<vmem>>, vector<8x256xf32>
    tpu.vector_store %arg6[%c16_46, %c256_47], %76 {strides = array<i32>} : memref<72x512xf32, #tpu.memory_space<vmem>>, vector<8x256xf32>,
    %c241_i32_48 = arith.constant 241 : i32
    %78 = tpu.dynamic_rotate %60 by %c241_i32_48 dim 1 : vector<8x256xf32>, i32 -> vector<8x256xf32>
    %c240_i32_49 = arith.constant 240 : i32
    %79 = tpu.dynamic_rotate %60 by %c240_i32_49 dim 1 : vector<8x256xf32>, i32 -> vector<8x256xf32>
    %80 = arith.select %2, %78, %79 : vector<8x256xi1>, vector<8x256xf32>
    %c24_50 = arith.constant 24 : index
    %c0_51 = arith.constant 0 : index
    %81 = vector.load %arg2[%c24_50, %c0_51] : memref<72x256xf32, #tpu.memory_space<vmem>>, vector<8x256xf32>
    %82 = arith.mulf %80, %81 : vector<8x256xf32>
    %c24_52 = arith.constant 24 : index
    %c256_53 = arith.constant 256 : index
    %83 = vector.load %arg6[%c24_52, %c256_53] : memref<72x512xf32, #tpu.memory_space<vmem>>, vector<8x256xf32>
    tpu.vector_store %arg6[%c24_52, %c256_53], %82 {strides = array<i32>} : memref<72x512xf32, #tpu.memory_space<vmem>>, vector<8x256xf32>,
    %c239_i32_54 = arith.constant 239 : i32
    %84 = tpu.dynamic_rotate %60 by %c239_i32_54 dim 1 : vector<8x256xf32>, i32 -> vector<8x256xf32>
    %c34_i32_55 = arith.constant 34 : i32
    %85 = tpu.dynamic_rotate %60 by %c34_i32_55 dim 1 : vector<8x256xf32>, i32 -> vector<8x256xf32>
    %86 = arith.select %2, %84, %85 : vector<8x256xi1>, vector<8x256xf32>
    %c32_56 = arith.constant 32 : index
    %c0_57 = arith.constant 0 : index
    %87 = vector.load %arg2[%c32_56, %c0_57] : memref<72x256xf32, #tpu.memory_space<vmem>>, vector<8x256xf32>
    %88 = arith.mulf %86, %87 : vector<8x256xf32>
    %c32_58 = arith.constant 32 : index
    %c256_59 = arith.constant 256 : index
    %89 = vector.load %arg6[%c32_58, %c256_59] : memref<72x512xf32, #tpu.memory_space<vmem>>, vector<8x256xf32>
    tpu.vector_store %arg6[%c32_58, %c256_59], %88 {strides = array<i32>} : memref<72x512xf32, #tpu.memory_space<vmem>>, vector<8x256xf32>,
    %c32_i32_60 = arith.constant 32 : i32
    %90 = tpu.dynamic_rotate %60 by %c32_i32_60 dim 1 : vector<8x256xf32>, i32 -> vector<8x256xf32>
    %c30_i32_61 = arith.constant 30 : i32
    %91 = tpu.dynamic_rotate %60 by %c30_i32_61 dim 1 : vector<8x256xf32>, i32 -> vector<8x256xf32>
    %92 = arith.select %2, %90, %91 : vector<8x256xi1>, vector<8x256xf32>
    %c40_62 = arith.constant 40 : index
    %c0_63 = arith.constant 0 : index
    %93 = vector.load %arg2[%c40_62, %c0_63] : memref<72x256xf32, #tpu.memory_space<vmem>>, vector<8x256xf32>
    %94 = arith.mulf %92, %93 : vector<8x256xf32>
    %c40_64 = arith.constant 40 : index
    %c256_65 = arith.constant 256 : index
    %95 = vector.load %arg6[%c40_64, %c256_65] : memref<72x512xf32, #tpu.memory_space<vmem>>, vector<8x256xf32>
    tpu.vector_store %arg6[%c40_64, %c256_65], %94 {strides = array<i32>} : memref<72x512xf32, #tpu.memory_space<vmem>>, vector<8x256xf32>,
    %c2_i32_66 = arith.constant 2 : i32
    %96 = tpu.dynamic_rotate %60 by %c2_i32_66 dim 1 : vector<8x256xf32>, i32 -> vector<8x256xf32>
    %97 = arith.select %2, %96, %60 : vector<8x256xi1>, vector<8x256xf32>
    %c48_67 = arith.constant 48 : index
    %c0_68 = arith.constant 0 : index
    %98 = vector.load %arg2[%c48_67, %c0_68] : memref<72x256xf32, #tpu.memory_space<vmem>>, vector<8x256xf32>
    %99 = arith.mulf %97, %98 : vector<8x256xf32>
    %c48_69 = arith.constant 48 : index
    %c256_70 = arith.constant 256 : index
    %100 = vector.load %arg6[%c48_69, %c256_70] : memref<72x512xf32, #tpu.memory_space<vmem>>, vector<8x256xf32>
    tpu.vector_store %arg6[%c48_69, %c256_70], %99 {strides = array<i32>} : memref<72x512xf32, #tpu.memory_space<vmem>>, vector<8x256xf32>,
    %c254_i32_71 = arith.constant 254 : i32
    %101 = tpu.dynamic_rotate %60 by %c254_i32_71 dim 1 : vector<8x256xf32>, i32 -> vector<8x256xf32>
    %c226_i32_72 = arith.constant 226 : i32
    %102 = tpu.dynamic_rotate %60 by %c226_i32_72 dim 1 : vector<8x256xf32>, i32 -> vector<8x256xf32>
    %103 = arith.select %2, %101, %102 : vector<8x256xi1>, vector<8x256xf32>
    %c56_73 = arith.constant 56 : index
    %c0_74 = arith.constant 0 : index
    %104 = vector.load %arg2[%c56_73, %c0_74] : memref<72x256xf32, #tpu.memory_space<vmem>>, vector<8x256xf32>
    %105 = arith.mulf %103, %104 : vector<8x256xf32>
    %c56_75 = arith.constant 56 : index
    %c256_76 = arith.constant 256 : index
    %106 = vector.load %arg6[%c56_75, %c256_76] : memref<72x512xf32, #tpu.memory_space<vmem>>, vector<8x256xf32>
    tpu.vector_store %arg6[%c56_75, %c256_76], %105 {strides = array<i32>} : memref<72x512xf32, #tpu.memory_space<vmem>>, vector<8x256xf32>,
    %c224_i32_77 = arith.constant 224 : i32
    %107 = tpu.dynamic_rotate %60 by %c224_i32_77 dim 1 : vector<8x256xf32>, i32 -> vector<8x256xf32>
    %c222_i32_78 = arith.constant 222 : i32
    %108 = tpu.dynamic_rotate %60 by %c222_i32_78 dim 1 : vector<8x256xf32>, i32 -> vector<8x256xf32>
    %109 = arith.select %2, %107, %108 : vector<8x256xi1>, vector<8x256xf32>
    %c64_79 = arith.constant 64 : index
    %c0_80 = arith.constant 0 : index
    %110 = vector.load %arg2[%c64_79, %c0_80] : memref<72x256xf32, #tpu.memory_space<vmem>>, vector<8x256xf32>
    %111 = arith.mulf %109, %110 : vector<8x256xf32>
    %c64_81 = arith.constant 64 : index
    %c256_82 = arith.constant 256 : index
    %112 = vector.load %arg6[%c64_81, %c256_82] : memref<72x512xf32, #tpu.memory_space<vmem>>, vector<8x256xf32>
    tpu.vector_store %arg6[%c64_81, %c256_82], %111 {strides = array<i32>} : memref<72x512xf32, #tpu.memory_space<vmem>>, vector<8x256xf32>,
    %c0_83 = arith.constant 0 : index
    %c0_84 = arith.constant 0 : index
    %113 = vector.load %arg3[%c0_83, %c0_84] : memref<4x72xf32, #tpu.memory_space<vmem>>, vector<4x72xf32>
    %c0_85 = arith.constant 0 : index
    %c0_86 = arith.constant 0 : index
    %114 = vector.load %arg6[%c0_85, %c0_86] : memref<72x512xf32, #tpu.memory_space<vmem>>, vector<72x512xf32>
    %cst = arith.constant dense<0.000000e+00> : vector<4x512xf32>
    %115 = tpu.matmul %113, %114, %cst {dimension_numbers = #tpu.dot_dimension_numbers<[1], [0], [0], [1], [0, 0, 1, 1], [], []>} : vector<4x72xf32>, vector<72x512xf32>, vector<4x512xf32> -> vector<4x512xf32>
    %c0_87 = arith.constant 0 : index
    %c0_88 = arith.constant 0 : index
    %116 = vector.load %arg4[%c0_87, %c0_88] : memref<4x1xf32, #tpu.memory_space<vmem>>, vector<4x1xf32>
    %117 = vector.broadcast %116 : vector<4x1xf32> to vector<4x512xf32>
    %118 = arith.addf %115, %117 : vector<4x512xf32>
    %119 = vector.extract_strided_slice %118 {offsets = [0, 0], sizes = [4, 256], strides = [1, 1]} : vector<4x512xf32> to vector<4x256xf32>
    %c0_89 = arith.constant 0 : index
    %c0_90 = arith.constant 0 : index
    %c0_91 = arith.constant 0 : index
    %120 = vector.load %arg5[%c0_89, %c0_90, %c0_91] : memref<2x4x256xf32, #tpu.memory_space<vmem>>, vector<1x4x256xf32>
    %121 = vector.shape_cast %120 : vector<1x4x256xf32> to vector<4x256xf32>
    %122 = vector.shape_cast %119 : vector<4x256xf32> to vector<1x4x256xf32>
    tpu.vector_store %arg5[%c0_89, %c0_90, %c0_91], %122 {strides = array<i32>} : memref<2x4x256xf32, #tpu.memory_space<vmem>>, vector<1x4x256xf32>,
    %123 = vector.extract_strided_slice %118 {offsets = [0, 256], sizes = [4, 256], strides = [1, 1]} : vector<4x512xf32> to vector<4x256xf32>
    %c1_92 = arith.constant 1 : index
    %c0_93 = arith.constant 0 : index
    %c0_94 = arith.constant 0 : index
    %124 = vector.load %arg5[%c1_92, %c0_93, %c0_94] : memref<2x4x256xf32, #tpu.memory_space<vmem>>, vector<1x4x256xf32>
    %125 = vector.shape_cast %124 : vector<1x4x256xf32> to vector<4x256xf32>
    %126 = vector.shape_cast %123 : vector<4x256xf32> to vector<1x4x256xf32>
    tpu.vector_store %arg5[%c1_92, %c0_93, %c0_94], %126 {strides = array<i32>} : memref<2x4x256xf32, #tpu.memory_space<vmem>>, vector<1x4x256xf32>,
    return
  }
  func.func @transform_0(%arg0: i32) -> (i32, i32, i32) {
    %c0_i32 = arith.constant 0 : i32
    %c0_i32_0 = arith.constant 0 : i32
    %c0_i32_1 = arith.constant 0 : i32
    return %arg0, %c0_i32, %c0_i32_0 : i32, i32, i32
  }
  func.func @transform_1(%arg0: i32) -> (i32, i32) {
    %c0_i32 = arith.constant 0 : i32
    %c0_i32_0 = arith.constant 0 : i32
    %c0_i32_1 = arith.constant 0 : i32
    return %c0_i32, %c0_i32_0 : i32, i32
  }
  func.func @transform_2(%arg0: i32) -> (i32, i32) {
    %c0_i32 = arith.constant 0 : i32
    %c0_i32_0 = arith.constant 0 : i32
    %c0_i32_1 = arith.constant 0 : i32
    return %c0_i32, %c0_i32_0 : i32, i32
  }
  func.func @transform_3(%arg0: i32) -> (i32, i32) {
    %c0_i32 = arith.constant 0 : i32
    %c0_i32_0 = arith.constant 0 : i32
    %c0_i32_1 = arith.constant 0 : i32
    return %c0_i32, %c0_i32_0 : i32, i32
  }
  func.func @transform_4(%arg0: i32) -> (i32, i32, i32) {
    %c0_i32 = arith.constant 0 : i32
    %c0_i32_0 = arith.constant 0 : i32
    %c0_i32_1 = arith.constant 0 : i32
    return %arg0, %c0_i32, %c0_i32_0 : i32, i32, i32
  }
}

</mosaic_0001>

<llo_original>
// kernel: tpu_custom_call.1
$region0: #{tpu_custom_call.1}
  #allocation0 [shape = 'u32[]', space=smem, size = 0x4, offset = 0x4, fixed_abs, tag = 'smem constant byte address 0x4 - core index']
  #allocation1 [shape = 'u32[144,128]{1,0:T(1,128)}', space=vmem, size = 0x12000, scoped, tag = 'internal scratch']
  #allocation2 [shape = 'f32[72,512]{1,0:T(8,128)}', space=vmem, size = 0x24000, scoped, tag = 'scratch operand']
  %s0 = inlined_call_operand.hbm [shape: f32[2,4,256], index: 0, kind: input, shape index: {}]
  %s1 = inlined_call_operand.hbm [shape: f32[72,256], index: 1, kind: input, shape index: {}]
  %s2 = inlined_call_operand.vmem [shape: f32[4,72], index: 2, kind: input, shape index: {}]
  %s3 = inlined_call_operand.vmem [shape: f32[4,1], index: 3, kind: input, shape index: {}]
  %s4 = inlined_call_operand.hbm [shape: f32[2,4,256], index: 4, kind: output, shape index: {}]
  %s5 = sld [smem:[#allocation0]]
  $region34: #{tpu_custom_call.1} parent=0
    _
  %s7 = ssub.s32 1, %s5
  %s8 = scalar_select 0, %s7, %s5
  $region1: #{tpu_custom_call.1} parent=0
    #allocation3 [shape = 'u8[8192]{0}', space=vmem, size = 0x2000, scoped, tag = 'input window, operand 0, single buffered']
    #allocation4 [shape = 's32[1]{0}', space=sflag, size = 0x4, scoped, tag = 'scoped memory for tpu_custom_call.1']
    #allocation5 [shape = 's32[1]{0}', space=sflag, size = 0x4, scoped, tag = 'scoped memory for tpu_custom_call.1']
    #allocation6 [shape = 'u8[73728]{0}', space=vmem, size = 0x12000, scoped, tag = 'input window, operand 1, single buffered']
    #allocation7 [shape = 's32[1]{0}', space=sflag, size = 0x4, scoped, tag = 'scoped memory for tpu_custom_call.1']
    #allocation8 [shape = 'u8[8192]{0}', space=vmem, size = 0x2000, scoped, tag = 'output window, operand 0, single buffered']
    %9 = vsyncpa [#allocation4], 0
    %10 = vsyncpa [#allocation7], 0
    %11 = vsyncpa [#allocation5], 0
    // Predicated region
    $region2: #{tpu_custom_call.1} parent=1 // pred_check
      _
    $region3: #{tpu_custom_call.1} parent=1 // pred_check_branch
      %13 = sbr.rel (0) target = $region5
    $region4: #{tpu_custom_call.1} parent=1 // pred_region
      %s15 = ssub.s32 256, 256
      %16 = vsyncadd [#allocation4], %s15
      %s17 = sshll.u32 [#allocation3], 4
      %s18 = int_to_ptr.vmem [resolvable:$true] %s17
      %23 = dma.hbm_to_vmem [thread:$0]  %s0, 256, %s18, [#allocation4], 128, 128, 8
    $region5: #{tpu_custom_call.1} parent=1 // pred_fallthru
      _
    // Predicated region
    $region6: #{tpu_custom_call.1} parent=1 // pred_check
      _
    $region7: #{tpu_custom_call.1} parent=1 // pred_check_branch
      %25 = sbr.rel (0) target = $region9
    $region8: #{tpu_custom_call.1} parent=1 // pred_region
      %s27 = ssub.s32 2304, 2304
      %28 = vsyncadd [#allocation7], %s27
      %s29 = sshll.u32 [#allocation6], 4
      %s30 = int_to_ptr.vmem [resolvable:$true] %s29
      %35 = dma.hbm_to_vmem [thread:$0]  %s1, 2304, %s30, [#allocation7], 256, 256, 16
    $region9: #{tpu_custom_call.1} parent=1 // pred_fallthru
      _
    // Predicated region
    $region10: #{tpu_custom_call.1} parent=1 // pred_check
      _
    $region11: #{tpu_custom_call.1} parent=1 // pred_check_branch
      %37 = sbr.rel (0) target = $region13
    $region12: #{tpu_custom_call.1} parent=1 // pred_region
      _
    $region13: #{tpu_custom_call.1} parent=1 // pred_fallthru
      _
    // Predicated region
    $region14: #{tpu_custom_call.1} parent=1 // pred_check
      _
    $region15: #{tpu_custom_call.1} parent=1 // pred_check_branch
      %39 = sbr.rel (0) target = $region17
    $region16: #{tpu_custom_call.1} parent=1 // pred_region
      _
    $region17: #{tpu_custom_call.1} parent=1 // pred_fallthru
      _
    // Predicated region
    $region18: #{tpu_custom_call.1} parent=1 // pred_check
      _
    $region19: #{tpu_custom_call.1} parent=1 // pred_check_branch
      %41 = sbr.rel (0) target = $region21
    $region20: #{tpu_custom_call.1} parent=1 // pred_region
      %42 = dma.done [#allocation4], 256
    $region21: #{tpu_custom_call.1} parent=1 // pred_fallthru
      _
    // Predicated region
    $region22: #{tpu_custom_call.1} parent=1 // pred_check
      _
    $region23: #{tpu_custom_call.1} parent=1 // pred_check_branch
      %44 = sbr.rel (0) target = $region25
    $region24: #{tpu_custom_call.1} parent=1 // pred_region
      %45 = dma.done [#allocation7], 2304
    $region25: #{tpu_custom_call.1} parent=1 // pred_fallthru
      _
    %v46 = vlaneseq
    %v47 = vshrl.u32 %v46, 7
    %vm48 = vcmp.lt.s32.totalorder %v47, 4
    %v49 = vld [vmem:[#allocation3] sm:$0xff]
    %v51 = vcombine.high %v49, %v49
    %v53 = vcombine.low %v49, %v49
    %vm55 = vcmask 1043456
    %v56 = vsel %vm55, %v49, %v53
    %v57 = vsel %vm55, %v51, %v49
    %58 = vrot.lane.b32.xlu0 %v56, 17
    %v59 = vpop.permute.xlu0 %58
    %60 = vrot.lane.b32.xlu0 %v57, 17
    %v61 = vpop.permute.xlu0 %60
    %v62 = vlaneseq
    %v63 = vand.u32 %v62, 127
    %vm64 = vcmp.lt.s32.totalorder %v63, 17
    %v65 = vsel %vm64, %v59, %v61
    %v66 = vsel %vm64, %v61, %v59
    %67 = vrot.lane.b32.xlu0 %v56, 16
    %v68 = vpop.permute.xlu0 %67
    %69 = vrot.lane.b32.xlu0 %v57, 16
    %v70 = vpop.permute.xlu0 %69
    %vm71 = vcmp.lt.s32.totalorder %v63, 16
    %v72 = vsel %vm71, %v68, %v70
    %v73 = vsel %vm71, %v70, %v68
    %v74 = vsel %vm48, %v66, %v73
    %v75 = vsel %vm48, %v65, %v72
    %v76 = vld [vmem:[#allocation6] sm:$0xff]
    %v77 = vld [vmem:[#allocation6 + $0x8] sm:$0xff]
    %v78 = vmul.f32 %v74, %v76
    %v79 = vmul.f32 %v75, %v77
    %80 = vst [vmem:[#allocation2] sm:$0xff] %v78
    %81 = vst [vmem:[#allocation2 + $0x8] sm:$0xff] %v79
    %82 = vrot.lane.b32.xlu0 %v56, 15
    %v83 = vpop.permute.xlu0 %82
    %84 = vrot.lane.b32.xlu0 %v57, 15
    %v85 = vpop.permute.xlu0 %84
    %vm86 = vcmp.lt.s32.totalorder %v63, 15
    %v87 = vsel %vm86, %v83, %v85
    %v88 = vsel %vm86, %v85, %v83
    %89 = vrot.lane.b32.xlu0 %v56, 1
    %v90 = vpop.permute.xlu0 %89
    %91 = vrot.lane.b32.xlu0 %v57, 1
    %v92 = vpop.permute.xlu0 %91
    %vm93 = vcmp.lt.s32.totalorder %v63, 1
    %v94 = vsel %vm93, %v90, %v92
    %v95 = vsel %vm93, %v92, %v90
    %v96 = vsel %vm48, %v88, %v95
    %v97 = vsel %vm48, %v87, %v94
    %v98 = vld [vmem:[#allocation6 + $0x10] sm:$0xff]
    %v99 = vld [vmem:[#allocation6 + $0x18] sm:$0xff]
    %v100 = vmul.f32 %v96, %v98
    %v101 = vmul.f32 %v97, %v99
    %102 = vst [vmem:[#allocation2 + $0x20] sm:$0xff] %v100
    %103 = vst [vmem:[#allocation2 + $0x28] sm:$0xff] %v101
    %104 = vrot.lane.b32.xlu0 %v56, 127
    %v105 = vpop.permute.xlu0 %104
    %106 = vrot.lane.b32.xlu0 %v57, 127
    %v107 = vpop.permute.xlu0 %106
    %vm108 = vcmp.lt.s32.totalorder %v63, 127
    %v109 = vsel %vm108, %v105, %v107
    %v110 = vsel %vm108, %v107, %v105
    %v111 = vsel %vm48, %v56, %v109
    %v112 = vsel %vm48, %v57, %v110
    %v113 = vld [vmem:[#allocation6 + $0x20] sm:$0xff]
    %v114 = vld [vmem:[#allocation6 + $0x28] sm:$0xff]
    %v115 = vmul.f32 %v111, %v113
    %v116 = vmul.f32 %v112, %v114
    %117 = vst [vmem:[#allocation2 + $0x40] sm:$0xff] %v115
    %118 = vst [vmem:[#allocation2 + $0x48] sm:$0xff] %v116
    %119 = vrot.lane.b32.xlu0 %v56, 113
    %v120 = vpop.permute.xlu0 %119
    %121 = vrot.lane.b32.xlu0 %v57, 113
    %v122 = vpop.permute.xlu0 %121
    %vm123 = vcmp.lt.s32.totalorder %v63, 113
    %v124 = vsel %vm123, %v120, %v122
    %v125 = vsel %vm123, %v122, %v120
    %126 = vrot.lane.b32.xlu0 %v56, 112
    %v127 = vpop.permute.xlu0 %126
    %128 = vrot.lane.b32.xlu0 %v57, 112
    %v129 = vpop.permute.xlu0 %128
    %vm130 = vcmp.lt.s32.totalorder %v63, 112
    %v131 = vsel %vm130, %v127, %v129
    %v132 = vsel %vm130, %v129, %v127
    %v133 = vsel %vm48, %v124, %v131
    %v134 = vsel %vm48, %v125, %v132
    %v135 = vld [vmem:[#allocation6 + $0x30] sm:$0xff]
    %v136 = vld [vmem:[#allocation6 + $0x38] sm:$0xff]
    %v137 = vmul.f32 %v133, %v135
    %v138 = vmul.f32 %v134, %v136
    %139 = vst [vmem:[#allocation2 + $0x60] sm:$0xff] %v137
    %140 = vst [vmem:[#allocation2 + $0x68] sm:$0xff] %v138
    %141 = vrot.lane.b32.xlu0 %v56, 111
    %v142 = vpop.permute.xlu0 %141
    %143 = vrot.lane.b32.xlu0 %v57, 111
    %v144 = vpop.permute.xlu0 %143
    %vm145 = vcmp.lt.s32.totalorder %v63, 111
    %v146 = vsel %vm145, %v142, %v144
    %v147 = vsel %vm145, %v144, %v142
    %148 = vrot.lane.b32.xlu0 %v56, 34
    %v149 = vpop.permute.xlu0 %148
    %150 = vrot.lane.b32.xlu0 %v57, 34
    %v151 = vpop.permute.xlu0 %150
    %vm152 = vcmp.lt.s32.totalorder %v63, 34
    %v153 = vsel %vm152, %v149, %v151
    %v154 = vsel %vm152, %v151, %v149
    %v155 = vsel %vm48, %v146, %v154
    %v156 = vsel %vm48, %v147, %v153
    %v157 = vld [vmem:[#allocation6 + $0x40] sm:$0xff]
    %v158 = vld [vmem:[#allocation6 + $0x48] sm:$0xff]
    %v159 = vmul.f32 %v155, %v157
    %v160 = vmul.f32 %v156, %v158
    %161 = vst [vmem:[#allocation2 + $0x80] sm:$0xff] %v159
    %162 = vst [vmem:[#allocation2 + $0x88] sm:$0xff] %v160
    %163 = vrot.lane.b32.xlu0 %v56, 32
    %v164 = vpop.permute.xlu0 %163
    %165 = vrot.lane.b32.xlu0 %v57, 32
    %v166 = vpop.permute.xlu0 %165
    %vm167 = vcmp.lt.s32.totalorder %v63, 32
    %v168 = vsel %vm167, %v164, %v166
    %v169 = vsel %vm167, %v166, %v164
    %170 = vrot.lane.b32.xlu0 %v56, 30
    %v171 = vpop.permute.xlu0 %170
    %172 = vrot.lane.b32.xlu0 %v57, 30
    %v173 = vpop.permute.xlu0 %172
    %vm174 = vcmp.lt.s32.totalorder %v63, 30
    %v175 = vsel %vm174, %v171, %v173
    %v176 = vsel %vm174, %v173, %v171
    %v177 = vsel %vm48, %v169, %v176
    %v178 = vsel %vm48, %v168, %v175
    %v179 = vld [vmem:[#allocation6 + $0x50] sm:$0xff]
    %v180 = vld [vmem:[#allocation6 + $0x58] sm:$0xff]
    %v181 = vmul.f32 %v177, %v179
    %v182 = vmul.f32 %v178, %v180
    %183 = vst [vmem:[#allocation2 + $0xa0] sm:$0xff] %v181
    %184 = vst [vmem:[#allocation2 + $0xa8] sm:$0xff] %v182
    %185 = vrot.lane.b32.xlu0 %v56, 2
    %v186 = vpop.permute.xlu0 %185
    %187 = vrot.lane.b32.xlu0 %v57, 2
    %v188 = vpop.permute.xlu0 %187
    %vm189 = vcmp.lt.s32.totalorder %v63, 2
    %v190 = vsel %vm189, %v186, %v188
    %v191 = vsel %vm189, %v188, %v186
    %v192 = vsel %vm48, %v191, %v56
    %v193 = vsel %vm48, %v190, %v57
    %v194 = vld [vmem:[#allocation6 + $0x60] sm:$0xff]
    %v195 = vld [vmem:[#allocation6 + $0x68] sm:$0xff]
    %v196 = vmul.f32 %v192, %v194
    %v197 = vmul.f32 %v193, %v195
    %198 = vst [vmem:[#allocation2 + $0xc0] sm:$0xff] %v196
    %199 = vst [vmem:[#allocation2 + $0xc8] sm:$0xff] %v197
    %200 = vrot.lane.b32.xlu0 %v56, 126
    %v201 = vpop.permute.xlu0 %200
    %202 = vrot.lane.b32.xlu0 %v57, 126
    %v203 = vpop.permute.xlu0 %202
    %vm204 = vcmp.lt.s32.totalorder %v63, 126
    %v205 = vsel %vm204, %v201, %v203
    %v206 = vsel %vm204, %v203, %v201
    %207 = vrot.lane.b32.xlu0 %v56, 98
    %v208 = vpop.permute.xlu0 %207
    %209 = vrot.lane.b32.xlu0 %v57, 98
    %v210 = vpop.permute.xlu0 %209
    %vm211 = vcmp.lt.s32.totalorder %v63, 98
    %v212 = vsel %vm211, %v208, %v210
    %v213 = vsel %vm211, %v210, %v208
    %v214 = vsel %vm48, %v205, %v212
    %v215 = vsel %vm48, %v206, %v213
    %v216 = vld [vmem:[#allocation6 + $0x70] sm:$0xff]
    %v217 = vld [vmem:[#allocation6 + $0x78] sm:$0xff]
    %v218 = vmul.f32 %v214, %v216
    %v219 = vmul.f32 %v215, %v217
    %220 = vst [vmem:[#allocation2 + $0xe0] sm:$0xff] %v218
    %221 = vst [vmem:[#allocation2 + $0xe8] sm:$0xff] %v219
    %222 = vrot.lane.b32.xlu0 %v56, 96
    %v223 = vpop.permute.xlu0 %222
    %224 = vrot.lane.b32.xlu0 %v57, 96
    %v225 = vpop.permute.xlu0 %224
    %vm226 = vcmp.lt.s32.totalorder %v63, 96
    %v227 = vsel %vm226, %v223, %v225
    %v228 = vsel %vm226, %v225, %v223
    %229 = vrot.lane.b32.xlu0 %v56, 94
    %v230 = vpop.permute.xlu0 %229
    %231 = vrot.lane.b32.xlu0 %v57, 94
    %v232 = vpop.permute.xlu0 %231
    %vm233 = vcmp.lt.s32.totalorder %v63, 94
    %v234 = vsel %vm233, %v230, %v232
    %v235 = vsel %vm233, %v232, %v230
    %v236 = vsel %vm48, %v227, %v234
    %v237 = vsel %vm48, %v228, %v235
    %v238 = vld [vmem:[#allocation6 + $0x80] sm:$0xff]
    %v239 = vld [vmem:[#allocation6 + $0x88] sm:$0xff]
    %v240 = vmul.f32 %v236, %v238
    %v241 = vmul.f32 %v237, %v239
    %242 = vst [vmem:[#allocation2 + $0x100] sm:$0xff] %v240
    %243 = vst [vmem:[#allocation2 + $0x108] sm:$0xff] %v241
    %s244 = scalar_lea.vmem [#allocation3], 8
    %v245 = vld [vmem:[%s244] sm:$0xff]
    %v247 = vcombine.high %v245, %v245
    %v249 = vcombine.low %v245, %v245
    %v251 = vsel %vm55, %v245, %v249
    %v252 = vsel %vm55, %v247, %v245
    %253 = vrot.lane.b32.xlu0 %v251, 17
    %v254 = vpop.permute.xlu0 %253
    %255 = vrot.lane.b32.xlu0 %v252, 17
    %v256 = vpop.permute.xlu0 %255
    %v257 = vsel %vm64, %v254, %v256
    %v258 = vsel %vm64, %v256, %v254
    %259 = vrot.lane.b32.xlu0 %v251, 16
    %v260 = vpop.permute.xlu0 %259
    %261 = vrot.lane.b32.xlu0 %v252, 16
    %v262 = vpop.permute.xlu0 %261
    %v263 = vsel %vm71, %v260, %v262
    %v264 = vsel %vm71, %v262, %v260
    %v265 = vsel %vm48, %v258, %v264
    %v266 = vsel %vm48, %v257, %v263
    %v267 = vld [vmem:[#allocation6] sm:$0xff]
    %v268 = vld [vmem:[#allocation6 + $0x8] sm:$0xff]
    %v269 = vmul.f32 %v265, %v267
    %v270 = vmul.f32 %v266, %v268
    %271 = vst [vmem:[#allocation2 + $0x10] sm:$0xff] %v269
    %272 = vst [vmem:[#allocation2 + $0x18] sm:$0xff] %v270
    %273 = vrot.lane.b32.xlu0 %v251, 15
    %v274 = vpop.permute.xlu0 %273
    %275 = vrot.lane.b32.xlu0 %v252, 15
    %v276 = vpop.permute.xlu0 %275
    %v277 = vsel %vm86, %v274, %v276
    %v278 = vsel %vm86, %v276, %v274
    %279 = vrot.lane.b32.xlu0 %v251, 1
    %v280 = vpop.permute.xlu0 %279
    %281 = vrot.lane.b32.xlu0 %v252, 1
    %v282 = vpop.permute.xlu0 %281
    %v283 = vsel %vm93, %v280, %v282
    %v284 = vsel %vm93, %v282, %v280
    %v285 = vsel %vm48, %v278, %v284
    %v286 = vsel %vm48, %v277, %v283
    %v287 = vld [vmem:[#allocation6 + $0x10] sm:$0xff]
    %v288 = vld [vmem:[#allocation6 + $0x18] sm:$0xff]
    %v289 = vmul.f32 %v285, %v287
    %v290 = vmul.f32 %v286, %v288
    %291 = vst [vmem:[#allocation2 + $0x30] sm:$0xff] %v289
    %292 = vst [vmem:[#allocation2 + $0x38] sm:$0xff] %v290
    %293 = vrot.lane.b32.xlu0 %v251, 127
    %v294 = vpop.permute.xlu0 %293
    %295 = vrot.lane.b32.xlu0 %v252, 127
    %v296 = vpop.permute.xlu0 %295
    %v297 = vsel %vm108, %v294, %v296
    %v298 = vsel %vm108, %v296, %v294
    %v299 = vsel %vm48, %v251, %v297
    %v300 = vsel %vm48, %v252, %v298
    %v301 = vld [vmem:[#allocation6 + $0x20] sm:$0xff]
    %v302 = vld [vmem:[#allocation6 + $0x28] sm:$0xff]
    %v303 = vmul.f32 %v299, %v301
    %v304 = vmul.f32 %v300, %v302
    %305 = vst [vmem:[#allocation2 + $0x50] sm:$0xff] %v303
    %306 = vst [vmem:[#allocation2 + $0x58] sm:$0xff] %v304
    %307 = vrot.lane.b32.xlu0 %v251, 113
    %v308 = vpop.permute.xlu0 %307
    %309 = vrot.lane.b32.xlu0 %v252, 113
    %v310 = vpop.permute.xlu0 %309
    %v311 = vsel %vm123, %v308, %v310
    %v312 = vsel %vm123, %v310, %v308
    %313 = vrot.lane.b32.xlu0 %v251, 112
    %v314 = vpop.permute.xlu0 %313
    %315 = vrot.lane.b32.xlu0 %v252, 112
    %v316 = vpop.permute.xlu0 %315
    %v317 = vsel %vm130, %v314, %v316
    %v318 = vsel %vm130, %v316, %v314
    %v319 = vsel %vm48, %v311, %v317
    %v320 = vsel %vm48, %v312, %v318
    %v321 = vld [vmem:[#allocation6 + $0x30] sm:$0xff]
    %v322 = vld [vmem:[#allocation6 + $0x38] sm:$0xff]
    %v323 = vmul.f32 %v319, %v321
    %v324 = vmul.f32 %v320, %v322
    %325 = vst [vmem:[#allocation2 + $0x70] sm:$0xff] %v323
    %326 = vst [vmem:[#allocation2 + $0x78] sm:$0xff] %v324
    %327 = vrot.lane.b32.xlu0 %v251, 111
    %v328 = vpop.permute.xlu0 %327
    %329 = vrot.lane.b32.xlu0 %v252, 111
    %v330 = vpop.permute.xlu0 %329
    %v331 = vsel %vm145, %v328, %v330
    %v332 = vsel %vm145, %v330, %v328
    %333 = vrot.lane.b32.xlu0 %v251, 34
    %v334 = vpop.permute.xlu0 %333
    %335 = vrot.lane.b32.xlu0 %v252, 34
    %v336 = vpop.permute.xlu0 %335
    %v337 = vsel %vm152, %v334, %v336
    %v338 = vsel %vm152, %v336, %v334
    %v339 = vsel %vm48, %v331, %v338
    %v340 = vsel %vm48, %v332, %v337
    %v341 = vld [vmem:[#allocation6 + $0x40] sm:$0xff]
    %v342 = vld [vmem:[#allocation6 + $0x48] sm:$0xff]
    %v343 = vmul.f32 %v339, %v341
    %v344 = vmul.f32 %v340, %v342
    %345 = vst [vmem:[#allocation2 + $0x90] sm:$0xff] %v343
    %346 = vst [vmem:[#allocation2 + $0x98] sm:$0xff] %v344
    %347 = vrot.lane.b32.xlu0 %v251, 32
    %v348 = vpop.permute.xlu0 %347
    %349 = vrot.lane.b32.xlu0 %v252, 32
    %v350 = vpop.permute.xlu0 %349
    %v351 = vsel %vm167, %v348, %v350
    %v352 = vsel %vm167, %v350, %v348
    %353 = vrot.lane.b32.xlu0 %v251, 30
    %v354 = vpop.permute.xlu0 %353
    %355 = vrot.lane.b32.xlu0 %v252, 30
    %v356 = vpop.permute.xlu0 %355
    %v357 = vsel %vm174, %v354, %v356
    %v358 = vsel %vm174, %v356, %v354
    %v359 = vsel %vm48, %v352, %v358
    %v360 = vsel %vm48, %v351, %v357
    %v361 = vld [vmem:[#allocation6 + $0x50] sm:$0xff]
    %v362 = vld [vmem:[#allocation6 + $0x58] sm:$0xff]
    %v363 = vmul.f32 %v359, %v361
    %v364 = vmul.f32 %v360, %v362
    %365 = vst [vmem:[#allocation2 + $0xb0] sm:$0xff] %v363
    %366 = vst [vmem:[#allocation2 + $0xb8] sm:$0xff] %v364
    %367 = vrot.lane.b32.xlu0 %v251, 2
    %v368 = vpop.permute.xlu0 %367
    %369 = vrot.lane.b32.xlu0 %v252, 2
    %v370 = vpop.permute.xlu0 %369
    %v371 = vsel %vm189, %v368, %v370
    %v372 = vsel %vm189, %v370, %v368
    %v373 = vsel %vm48, %v372, %v251
    %v374 = vsel %vm48, %v371, %v252
    %v375 = vld [vmem:[#allocation6 + $0x60] sm:$0xff]
    %v376 = vld [vmem:[#allocation6 + $0x68] sm:$0xff]
    %v377 = vmul.f32 %v373, %v375
    %v378 = vmul.f32 %v374, %v376
    %379 = vst [vmem:[#allocation2 + $0xd0] sm:$0xff] %v377
    %380 = vst [vmem:[#allocation2 + $0xd8] sm:$0xff] %v378
    %381 = vrot.lane.b32.xlu0 %v251, 126
    %v382 = vpop.permute.xlu0 %381
    %383 = vrot.lane.b32.xlu0 %v252, 126
    %v384 = vpop.permute.xlu0 %383
    %v385 = vsel %vm204, %v382, %v384
    %v386 = vsel %vm204, %v384, %v382
    %387 = vrot.lane.b32.xlu0 %v251, 98
    %v388 = vpop.permute.xlu0 %387
    %389 = vrot.lane.b32.xlu0 %v252, 98
    %v390 = vpop.permute.xlu0 %389
    %v391 = vsel %vm211, %v388, %v390
    %v392 = vsel %vm211, %v390, %v388
    %v393 = vsel %vm48, %v385, %v391
    %v394 = vsel %vm48, %v386, %v392
    %v395 = vld [vmem:[#allocation6 + $0x70] sm:$0xff]
    %v396 = vld [vmem:[#allocation6 + $0x78] sm:$0xff]
    %v397 = vmul.f32 %v393, %v395
    %v398 = vmul.f32 %v394, %v396
    %399 = vst [vmem:[#allocation2 + $0xf0] sm:$0xff] %v397
    %400 = vst [vmem:[#allocation2 + $0xf8] sm:$0xff] %v398
    %401 = vrot.lane.b32.xlu0 %v251, 96
    %v402 = vpop.permute.xlu0 %401
    %403 = vrot.lane.b32.xlu0 %v252, 96
    %v404 = vpop.permute.xlu0 %403
    %v405 = vsel %vm226, %v402, %v404
    %v406 = vsel %vm226, %v404, %v402
    %407 = vrot.lane.b32.xlu0 %v251, 94
    %v408 = vpop.permute.xlu0 %407
    %409 = vrot.lane.b32.xlu0 %v252, 94
    %v410 = vpop.permute.xlu0 %409
    %v411 = vsel %vm233, %v408, %v410
    %v412 = vsel %vm233, %v410, %v408
    %v413 = vsel %vm48, %v405, %v411
    %v414 = vsel %vm48, %v406, %v412
    %v415 = vld [vmem:[#allocation6 + $0x80] sm:$0xff]
    %v416 = vld [vmem:[#allocation6 + $0x88] sm:$0xff]
    %v417 = vmul.f32 %v413, %v415
    %v418 = vmul.f32 %v414, %v416
    %419 = vst [vmem:[#allocation2 + $0x110] sm:$0xff] %v417
    %420 = vst [vmem:[#allocation2 + $0x118] sm:$0xff] %v418
    %v421 = vld [vmem:[%s2] sm:$0xf]
    %v422 = vld [vmem:[#allocation2] sm:$0xff]
    %v423 = vld [vmem:[#allocation2 + $0x8] sm:$0xff]
    %v424 = vld [vmem:[#allocation2 + $0x10] sm:$0xff]
    %v425 = vld [vmem:[#allocation2 + $0x18] sm:$0xff]
    %v426 = vld [vmem:[#allocation2 + $0x20] sm:$0xff]
    %v427 = vld [vmem:[#allocation2 + $0x28] sm:$0xff]
    %v428 = vld [vmem:[#allocation2 + $0x30] sm:$0xff]
    %v429 = vld [vmem:[#allocation2 + $0x38] sm:$0xff]
    %v430 = vld [vmem:[#allocation2 + $0x40] sm:$0xff]
    %v431 = vld [vmem:[#allocation2 + $0x48] sm:$0xff]
    %v432 = vld [vmem:[#allocation2 + $0x50] sm:$0xff]
    %v433 = vld [vmem:[#allocation2 + $0x58] sm:$0xff]
    %v434 = vld [vmem:[#allocation2 + $0x60] sm:$0xff]
    %v435 = vld [vmem:[#allocation2 + $0x68] sm:$0xff]
    %v436 = vld [vmem:[#allocation2 + $0x70] sm:$0xff]
    %v437 = vld [vmem:[#allocation2 + $0x78] sm:$0xff]
    %v438 = vld [vmem:[#allocation2 + $0x80] sm:$0xff]
    %v439 = vld [vmem:[#allocation2 + $0x88] sm:$0xff]
    %v440 = vld [vmem:[#allocation2 + $0x90] sm:$0xff]
    %v441 = vld [vmem:[#allocation2 + $0x98] sm:$0xff]
    %v442 = vld [vmem:[#allocation2 + $0xa0] sm:$0xff]
    %v443 = vld [vmem:[#allocation2 + $0xa8] sm:$0xff]
    %v444 = vld [vmem:[#allocation2 + $0xb0] sm:$0xff]
    %v445 = vld [vmem:[#allocation2 + $0xb8] sm:$0xff]
    %v446 = vld [vmem:[#allocation2 + $0xc0] sm:$0xff]
    %v447 = vld [vmem:[#allocation2 + $0xc8] sm:$0xff]
    %v448 = vld [vmem:[#allocation2 + $0xd0] sm:$0xff]
    %v449 = vld [vmem:[#allocation2 + $0xd8] sm:$0xff]
    %v450 = vld [vmem:[#allocation2 + $0xe0] sm:$0xff]
    %v451 = vld [vmem:[#allocation2 + $0xe8] sm:$0xff]
    %v452 = vld [vmem:[#allocation2 + $0xf0] sm:$0xff]
    %v453 = vld [vmem:[#allocation2 + $0xf8] sm:$0xff]
    %v454 = vld [vmem:[#allocation2 + $0x100] sm:$0xff]
    %v455 = vld [vmem:[#allocation2 + $0x108] sm:$0xff]
    %v456 = vld [vmem:[#allocation2 + $0x110] sm:$0xff]
    %v457 = vld [vmem:[#allocation2 + $0x118] sm:$0xff]
    %v458 = vld [vmem:[%s3] sm:$0xf]
    %460 = vset.pattern.permute.xlu0 0
    %461 = vperm.xlu0 %460, %v458
    %v462 = vpop.permute.xlu0 %461
    %vm464 = vcmask 588800
    %v466 = vsel %vm464, %v421, 0
    %468 = vmatprep.subr.mxu0 %v423
    %469 = vmatpush1.msra.mxu0 %v422
    %470 = vmatprep.subr.mxu0 %v427
    %471 = vmatpush1.msra.mxu0 %v426
    %472 = vmatprep.subr.mxu0 %v431
    %473 = vmatpush1.msra.mxu0 %v430
    %474 = vmatprep.subr.mxu0 %v435
    %475 = vmatpush1.msra.mxu0 %v434
    %476 = vmatprep.subr.mxu0 %v439
    %477 = vmatpush1.msra.mxu0 %v438
    %478 = vmatprep.subr.mxu0 %v443
    %479 = vmatpush1.msra.mxu0 %v442
    %480 = vmatprep.subr.mxu0 %v447
    %481 = vmatpush1.msra.mxu0 %v446
    %482 = vmatprep.subr.mxu0 %v451
    %483 = vmatpush1.msra.mxu0 %v450
    %484 = vmatprep.subr.mxu0 %v455
    %485 = vmatpush1.msra.mxu0 %v454
    %486 = vmatprep.subr.mxu0 0.0
    %487 = vmatpush1.msra.mxu0 0.0
    %488 = vmatprep.subr.mxu0 0.0
    %489 = vmatpush1.msra.mxu0 0.0
    %490 = vmatprep.subr.mxu0 0.0
    %491 = vmatpush1.msra.mxu0 0.0
    %492 = vmatprep.subr.mxu0 0.0
    %493 = vmatpush1.msra.mxu0 0.0
    %494 = vmatprep.subr.mxu0 0.0
    %495 = vmatpush1.msra.mxu0 0.0
    %496 = vmatprep.subr.mxu0 0.0
    %497 = vmatpush1.msra.mxu0 0.0
    %498 = vmatprep.subr.mxu0 0.0
    %499 = vmatpush1.msra.mxu0 0.0
    %500 = vmatprep.subr.mxu0 0.0
    %501 = vmatpush1.msra.mxu0 0.0
    %502 = vmatprep.subr.mxu0 0.0
    %503 = vmatpush1.msra.mxu0 0.0
    %504 = vmatprep.subr.mxu0 0.0
    %505 = vmatpush1.msra.mxu0 0.0
    %506 = vmatprep.subr.mxu0 0.0
    %507 = vmatpush1.msra.mxu0 0.0
    %508 = vmatprep.subr.mxu0 0.0
    %509 = vmatpush1.msra.mxu0 0.0
    %510 = vmatprep.subr.mxu0 0.0
    %511 = vmatpush1.msra.mxu0 0.0
    %512 = vmatprep.subr.mxu0 0.0
    %513 = vmatpush1.msra.mxu0 0.0
    %514 = vmatprep.subr.mxu0 0.0
    %515 = vmatpush1.msra.mxu0 0.0
    %516 = vmatprep.subr.mxu0 0.0
    %517 = vmatpush1.msra.mxu0 0.0
    %518 = vmatprep.subr.mxu0 0.0
    %519 = vmatpush1.msra.mxu0 0.0
    %520 = vmatprep.subr.mxu0 0.0
    %521 = vmatpush1.msra.mxu0 0.0
    %522 = vmatprep.subr.mxu0 0.0
    %523 = vmatpush1.msra.mxu0 0.0
    %524 = vmatprep.subr.mxu0 0.0
    %525 = vmatpush1.msra.mxu0 0.0
    %526 = vmatprep.subr.mxu0 0.0
    %527 = vmatpush1.msra.mxu0 0.0
    %528 = vmatprep.subr.mxu0 0.0
    %529 = vmatpush1.msra.mxu0 0.0
    %530 = vmatprep.subr.mxu0 0.0
    %531 = vmatpush1.msra.mxu0 0.0
    %532 = vmatprep.mubr.f32.mxu0 0.0
    %533 = vmatmul.mubr.f32.gmra.mrb[0].mxu0 %v466
    %v534 = vpop.f32.mrb[0].mxu0
    %v535 = vadd.f32 %v462, %v534
    %v536 = vpop.f32.mrb[0].mxu0
    %v537 = vadd.f32 %v462, %v536
    %538 = vdwg.mxu0
    %539 = vmatprep.subr.mxu0 %v425
    %540 = vmatpush1.msra.mxu0 %v424
    %541 = vmatprep.subr.mxu0 %v429
    %542 = vmatpush1.msra.mxu0 %v428
    %543 = vmatprep.subr.mxu0 %v433
    %544 = vmatpush1.msra.mxu0 %v432
    %545 = vmatprep.subr.mxu0 %v437
    %546 = vmatpush1.msra.mxu0 %v436
    %547 = vmatprep.subr.mxu0 %v441
    %548 = vmatpush1.msra.mxu0 %v440
    %549 = vmatprep.subr.mxu0 %v445
    %550 = vmatpush1.msra.mxu0 %v444
    %551 = vmatprep.subr.mxu0 %v449
    %552 = vmatpush1.msra.mxu0 %v448
    %553 = vmatprep.subr.mxu0 %v453
    %554 = vmatpush1.msra.mxu0 %v452
    %555 = vmatprep.subr.mxu0 %v457
    %556 = vmatpush1.msra.mxu0 %v456
    %557 = vmatprep.subr.mxu0 0.0
    %558 = vmatpush1.msra.mxu0 0.0
    %559 = vmatprep.subr.mxu0 0.0
    %560 = vmatpush1.msra.mxu0 0.0
    %561 = vmatprep.subr.mxu0 0.0
    %562 = vmatpush1.msra.mxu0 0.0
    %563 = vmatprep.subr.mxu0 0.0
    %564 = vmatpush1.msra.mxu0 0.0
    %565 = vmatprep.subr.mxu0 0.0
    %566 = vmatpush1.msra.mxu0 0.0
    %567 = vmatprep.subr.mxu0 0.0
    %568 = vmatpush1.msra.mxu0 0.0
    %569 = vmatprep.subr.mxu0 0.0
    %570 = vmatpush1.msra.mxu0 0.0
    %571 = vmatprep.subr.mxu0 0.0
    %572 = vmatpush1.msra.mxu0 0.0
    %573 = vmatprep.subr.mxu0 0.0
    %574 = vmatpush1.msra.mxu0 0.0
    %575 = vmatprep.subr.mxu0 0.0
    %576 = vmatpush1.msra.mxu0 0.0
    %577 = vmatprep.subr.mxu0 0.0
    %578 = vmatpush1.msra.mxu0 0.0
    %579 = vmatprep.subr.mxu0 0.0
    %580 = vmatpush1.msra.mxu0 0.0
    %581 = vmatprep.subr.mxu0 0.0
    %582 = vmatpush1.msra.mxu0 0.0
    %583 = vmatprep.subr.mxu0 0.0
    %584 = vmatpush1.msra.mxu0 0.0
    %585 = vmatprep.subr.mxu0 0.0
    %586 = vmatpush1.msra.mxu0 0.0
    %587 = vmatprep.subr.mxu0 0.0
    %588 = vmatpush1.msra.mxu0 0.0
    %589 = vmatprep.subr.mxu0 0.0
    %590 = vmatpush1.msra.mxu0 0.0
    %591 = vmatprep.subr.mxu0 0.0
    %592 = vmatpush1.msra.mxu0 0.0
    %593 = vmatprep.subr.mxu0 0.0
    %594 = vmatpush1.msra.mxu0 0.0
    %595 = vmatprep.subr.mxu0 0.0
    %596 = vmatpush1.msra.mxu0 0.0
    %597 = vmatprep.subr.mxu0 0.0
    %598 = vmatpush1.msra.mxu0 0.0
    %599 = vmatprep.subr.mxu0 0.0
    %600 = vmatpush1.msra.mxu0 0.0
    %601 = vmatprep.subr.mxu0 0.0
    %602 = vmatpush1.msra.mxu0 0.0
    %603 = vmatprep.mubr.f32.mxu0 0.0
    %604 = vmatmul.mubr.f32.gmra.mrb[0].mxu0 %v466
    %v605 = vpop.f32.mrb[0].mxu0
    %v606 = vadd.f32 %v462, %v605
    %v607 = vpop.f32.mrb[0].mxu0
    %v608 = vadd.f32 %v462, %v607
    %609 = vdwg.mxu0
    %v612 = vcombine.low %v535, %v537
    %614 = vst [vmem:[#allocation8] sm:$0xff] %v612
    %v617 = vcombine.low %v606, %v608
    %s619 = scalar_lea.vmem [#allocation8], 8
    %620 = vst [vmem:[%s619] sm:$0xff] %v617
    // Predicated region
    $region26: #{tpu_custom_call.1} parent=1 // pred_check
      _
    $region27: #{tpu_custom_call.1} parent=1 // pred_check_branch
      %622 = sbr.rel (0) target = $region29
    $region28: #{tpu_custom_call.1} parent=1 // pred_region
      %s624 = ssub.s32 256, 256
      %625 = vsyncadd [#allocation5], %s624
      %s626 = sshll.u32 [#allocation8], 4
      %s627 = int_to_ptr.vmem [resolvable:$true] %s626
      %632 = dma.vmem_to_hbm [thread:$0]  %s627, 256, %s4, [#allocation5], 128, 128, 8
    $region29: #{tpu_custom_call.1} parent=1 // pred_fallthru
      _
    // Predicated region
    $region30: #{tpu_custom_call.1} parent=1 // pred_check
      _
    $region31: #{tpu_custom_call.1} parent=1 // pred_check_branch
      %634 = sbr.rel (0) target = $region33
    $region32: #{tpu_custom_call.1} parent=1 // pred_region
      %635 = dma.done [#allocation5], 256
    $region33: #{tpu_custom_call.1} parent=1 // pred_fallthru
      _
    %636 = vsyncpa [#allocation4], 1
    %637 = vsyncpa [#allocation7], 1
    %638 = vsyncpa [#allocation5], 1

</llo_original>
